<compile_context>
chip_gen: v7x
topology: tpu7x:2x2x1
jax: 0.10.0
libtpu: 0.0.40
codegen_flags: <defaults>
</compile_context>

<pallas_src>
import functools

import jax
import jax.numpy as jnp
from jax.experimental import pallas as pl
from jax.experimental.pallas import tpu as pltpu

M_POS = 0.9
M_NEG = 0.1
LAMBDA = 0.5


def _margin_loss_kernel(y_pred_ref, label_ref, out_ref, *,
                        m_pos, m_neg, lambda_, num_classes, rows, tile_rows):
    # (tile_rows, W) tile of lane-packed predictions; upcast in-kernel so a
    # bf16 producer never pays for an f32 copy through HBM.
    y_pred = y_pred_ref[...].astype(jnp.float32)          # (tr, W) f32
    labels = label_ref[...].astype(jnp.int32)             # (tr, W) i32
    tr, w = y_pred.shape

    # Class id of every packed lane: 0..C-1 repeating (one vreg row of work).
    class_ids = jax.lax.broadcasted_iota(jnp.int32, (1, w), 1) % num_classes

    pos = jnp.maximum(m_pos - y_pred, 0.0)
    neg = jnp.maximum(y_pred - m_neg, 0.0)
    # targets*pos^2 + lambda*(1-targets)*neg^2 folded into a single select.
    losses = jnp.where(class_ids == labels, pos * pos, lambda_ * (neg * neg))

    # Ragged last tile: rows past the packed-array end hold HBM garbage
    # (jnp.where does not propagate NaN/inf from the unselected branch).
    if rows % tile_rows != 0:
        row = (pl.program_id(0) * tile_rows
               + jax.lax.broadcasted_iota(jnp.int32, (tr, 1), 0))
        losses = jnp.where(row < rows, losses, 0.0)

    out_ref[0, 0] = jnp.sum(losses)


def margin_loss(y_pred, y_true, size_average=True,
                m_pos=M_POS, m_neg=M_NEG, lambda_=LAMBDA, tile_rows=4096):
    """y_pred: (B, C) float32/bfloat16, y_true: (B,) int class labels."""
    b, c = y_pred.shape

    # ---- lane packing: G batch rows per packed row --------------------------
    g = max(1, 128 // c)                  # C=10 -> G=12 -> 120/128 live lanes
    b_pad = -(-b // g) * g
    r, w = b_pad // g, g * c

    if b_pad != b:
        # Zero-padded rows with label == C contribute exactly 0 loss:
        # never selected by any class id, and max(0 - m_neg, 0) == 0.
        y_pred = jnp.pad(y_pred, ((0, b_pad - b), (0, 0)))
    y_packed = y_pred.reshape(r, w)       # contiguous -> metadata-only reshape

    label_dtype = jnp.int8 if c < 127 else jnp.int32
    labels32 = y_true.astype(jnp.int32)
    if b_pad != b:
        labels32 = jnp.pad(labels32, (0, b_pad - b), constant_values=c)
    label_map = (jnp.broadcast_to(labels32[:, None], (b_pad, c))
                 .reshape(r, w).astype(label_dtype))

    # ---- tiling --------------------------------------------------------------
    tr = min(tile_rows, r)                # whole packed batch in one tile if it fits
    if tr < r:
        tr = max(8, (tr // 8) * 8)        # tiled blocks need sublane-aligned rows
    num_tiles = pl.cdiv(r, tr)

    # Double-buffered VMEM footprint (lanes pad to 128) -> scoped-VMEM request.
    # Stays <= 32 MiB so it is safe on v5e (128 MiB), v6e (128 MiB), v7x (64 MiB).
    lanes = -(-w // 128) * 128
    pred_bytes = jnp.dtype(y_pred.dtype).itemsize
    per_row = lanes * (pred_bytes + jnp.dtype(label_dtype).itemsize)
    vmem_limit = int(min(max(2 * tr * per_row + (4 << 20), 16 << 20), 32 << 20))

    kernel = functools.partial(
        _margin_loss_kernel, m_pos=m_pos, m_neg=m_neg, lambda_=lambda_,
        num_classes=c, rows=r, tile_rows=tr)

    partials = pl.pallas_call(
        kernel,
        out_shape=jax.ShapeDtypeStruct((num_tiles, 1), jnp.float32),
        grid=(num_tiles,),
        in_specs=[
            pl.BlockSpec((tr, w), lambda i: (i, 0)),   # packed y_pred tile
            pl.BlockSpec((tr, w), lambda i: (i, 0)),   # packed int8 label map
        ],
        # Per-tile scalar partial sums -> SMEM (no (8,128) tiling constraint).
        out_specs=pl.BlockSpec((1, 1), lambda i: (i, 0),
                               memory_space=pltpu.SMEM),
        compiler_params=pltpu.CompilerParams(
            dimension_semantics=("parallel",),
            vmem_limit_bytes=vmem_limit),
        cost_estimate=pl.CostEstimate(
            flops=8 * b * c,
            transcendentals=0,
            bytes_accessed=r * w * (pred_bytes + 1) + num_tiles * 4),
    )(y_packed, label_map)

    loss_sum = jnp.sum(partials)
    if size_average:
        # torch losses.mean() == sum / (B * C); divide by B and C separately
        # so each divisor is exactly representable in f32.
        return loss_sum / jnp.float32(b) / jnp.float32(c)
    return loss_sum


def _ref_loss(y_pred, y_true, size_average=True):
    """Plain-JAX reference matching the PyTorch module."""
    c = y_pred.shape[1]
    targets = jax.nn.one_hot(y_true, c, dtype=jnp.float32)
    losses = (targets * jnp.maximum(M_POS - y_pred, 0.0) ** 2
              + LAMBDA * (1.0 - targets) * jnp.maximum(y_pred - M_NEG, 0.0) ** 2)
    return jnp.mean(losses) if size_average else jnp.sum(losses)


if __name__ == "__main__":
    key = jax.random.PRNGKey(0)
    k1, k2, k3, k4 = jax.random.split(key, 4)

    # Case 1: tiny shape typical of the module (batch=2, num_classes=10).
    B, C = 2, 10
    y_pred = jax.random.uniform(k1, (B, C), dtype=jnp.float32)
    y_true = jax.random.randint(k2, (B,), 0, C, dtype=jnp.int32)
    loss = margin_loss(y_pred, y_true, size_average=True)
    jax.block_until_ready(loss)
    ref = _ref_loss(y_pred, y_true, size_average=True)
    assert jnp.allclose(loss, ref, rtol=1e-5, atol=1e-6), (loss, ref)

    # Case 2: batch not divisible by the packing factor + multi-tile grid with
    # a ragged last tile (exercises padding, tiling, and the row mask).
    B2, C2, TILE = 237, 10, 8
    y_pred2 = jax.random.uniform(k3, (B2, C2), dtype=jnp.float32)
    y_true2 = jax.random.randint(k4, (B2,), 0, C2, dtype=jnp.int32)
    loss2 = margin_loss(y_pred2, y_true2, size_average=False, tile_rows=TILE)
    jax.block_until_ready(loss2)
    ref2 = _ref_loss(y_pred2, y_true2, size_average=False)
    assert jnp.allclose(loss2, ref2, rtol=1e-5, atol=1e-4), (loss2, ref2)

    # Case 3: bf16 input path (no wrapper-side cast; upcast happens in-kernel).
    loss3 = margin_loss(y_pred.astype(jnp.bfloat16), y_true, size_average=True)
    jax.block_until_ready(loss3)
    assert jnp.allclose(loss3, ref, rtol=2e-2, atol=2e-3), (loss3, ref)

    print("KERNEL_OK")
</pallas_src>

<mosaic_0001>
module attributes {stable_mosaic.version = 11 : i64} {
  func.func @_margin_loss_kernel(%arg0: i32, %arg1: memref<1x120xf32, #tpu.memory_space<vmem>>, %arg2: memref<1x120xi8, #tpu.memory_space<vmem>>, %arg3: memref<1x1xf32, #tpu.memory_space<smem>>) attributes {dimension_semantics = [#tpu.dimension_semantics<parallel>], iteration_bounds = array<i64: 1>, scalar_prefetch = 0 : i64, scratch_operands = 0 : i64, tpu.core_type = #tpu.core_type<tc>, window_params = [{transform_indices = @transform_0, window_bounds = array<i64: 1, 120>}, {transform_indices = @transform_1, window_bounds = array<i64: 1, 120>}, {transform_indices = @transform_2, window_bounds = array<i64: 1, 1>}]} {
    %c0 = arith.constant 0 : index
    %c0_0 = arith.constant 0 : index
    %0 = vector.load %arg1[%c0, %c0_0] : memref<1x120xf32, #tpu.memory_space<vmem>>, vector<1x120xf32>
    %c0_1 = arith.constant 0 : index
    %c0_2 = arith.constant 0 : index
    %1 = vector.load %arg2[%c0_1, %c0_2] : memref<1x120xi8, #tpu.memory_space<vmem>>, vector<1x120xi8>
    %2 = arith.extsi %1 : vector<1x120xi8> to vector<1x120xi32>
    %3 = tpu.iota {dimensions = array<i32: 1>} : vector<1x120xi32>
    %c10_i32 = arith.constant 10 : i32
    %c0_i32 = arith.constant 0 : i32
    %4 = arith.cmpi eq, %c10_i32, %c0_i32 : i32
    %c1_i32 = arith.constant 1 : i32
    %5 = arith.select %4, %c1_i32, %c10_i32 : i32
    %6 = vector.broadcast %5 : i32 to vector<1x120xi32>
    %7 = arith.remsi %3, %6 : vector<1x120xi32>
    %c0_i32_3 = arith.constant 0 : i32
    %8 = vector.broadcast %c0_i32_3 : i32 to vector<1x120xi32>
    %9 = arith.cmpi ne, %7, %8 : vector<1x120xi32>
    %c0_i32_4 = arith.constant 0 : i32
    %10 = vector.broadcast %c0_i32_4 : i32 to vector<1x120xi32>
    %11 = arith.cmpi slt, %7, %10 : vector<1x120xi32>
    %c0_i32_5 = arith.constant 0 : i32
    %12 = arith.cmpi slt, %5, %c0_i32_5 : i32
    %13 = vector.broadcast %12 : i1 to vector<1x120xi1>
    %14 = vector.broadcast %13 : vector<1x120xi1> to vector<1x120xi1>
    %15 = arith.xori %11, %14 : vector<1x120xi1>
    %16 = arith.andi %15, %9 : vector<1x120xi1>
    %17 = vector.broadcast %5 : i32 to vector<1x120xi32>
    %18 = arith.addi %7, %17 : vector<1x120xi32>
    %19 = arith.select %16, %18, %7 : vector<1x120xi1>, vector<1x120xi32>
    %cst = arith.constant 0.899999976 : f32
    %20 = vector.broadcast %cst : f32 to vector<1x120xf32>
    %21 = arith.subf %20, %0 : vector<1x120xf32>
    %cst_6 = arith.constant 0.000000e+00 : f32
    %22 = vector.broadcast %cst_6 : f32 to vector<1x120xf32>
    %23 = arith.maximumf %21, %22 : vector<1x120xf32>
    %cst_7 = arith.constant 1.000000e-01 : f32
    %24 = vector.broadcast %cst_7 : f32 to vector<1x120xf32>
    %25 = arith.subf %0, %24 : vector<1x120xf32>
    %cst_8 = arith.constant 0.000000e+00 : f32
    %26 = vector.broadcast %cst_8 : f32 to vector<1x120xf32>
    %27 = arith.maximumf %25, %26 : vector<1x120xf32>
    %28 = arith.cmpi eq, %19, %2 : vector<1x120xi32>
    %29 = arith.mulf %23, %23 : vector<1x120xf32>
    %30 = arith.mulf %27, %27 : vector<1x120xf32>
    %cst_9 = arith.constant 5.000000e-01 : f32
    %31 = vector.broadcast %cst_9 : f32 to vector<1x120xf32>
    %32 = arith.mulf %31, %30 : vector<1x120xf32>
    %33 = arith.select %28, %29, %32 : vector<1x120xi1>, vector<1x120xf32>
    %34 = vector.shape_cast %33 : vector<1x120xf32> to vector<1x1x120xf32>
    %cst_10 = arith.constant dense<0.000000e+00> : vector<1xf32>
    %35 = vector.multi_reduction <add>, %34, %cst_10 [1, 2] : vector<1x1x120xf32> to vector<1xf32>
    %36 = vector.shape_cast %35 : vector<1xf32> to vector<1x1x1xf32>
    %37 = vector.extract %36[0, 0, 0] : f32 from vector<1x1x1xf32>
    %c0_11 = arith.constant 0 : index
    %c0_12 = arith.constant 0 : index
    %38 = memref.load %arg3[%c0_11, %c0_12] : memref<1x1xf32, #tpu.memory_space<smem>>
    memref.store %37, %arg3[%c0_11, %c0_12] : memref<1x1xf32, #tpu.memory_space<smem>>
    return
  }
  func.func @transform_0(%arg0: i32) -> (i32, i32) {
    %c0_i32 = arith.constant 0 : i32
    %c0_i32_0 = arith.constant 0 : i32
    return %arg0, %c0_i32 : i32, i32
  }
  func.func @transform_1(%arg0: i32) -> (i32, i32) {
    %c0_i32 = arith.constant 0 : i32
    %c0_i32_0 = arith.constant 0 : i32
    return %arg0, %c0_i32 : i32, i32
  }
  func.func @transform_2(%arg0: i32) -> (i32, i32) {
    %c0_i32 = arith.constant 0 : i32
    %c0_i32_0 = arith.constant 0 : i32
    return %arg0, %c0_i32 : i32, i32
  }
}

</mosaic_0001>

<llo_original>
// kernel: tpu_custom_call.1
$region0: #{tpu_custom_call.1}
  #allocation0 [shape = 'u32[]', space=smem, size = 0x4, offset = 0x4, fixed_abs, tag = 'smem constant byte address 0x4 - core index']
  #allocation1 [shape = 'u32[144,128]{1,0:T(1,128)}', space=vmem, size = 0x12000, scoped, tag = 'internal scratch']
  %s0 = inlined_call_operand.hbm [shape: f32[1,120], index: 0, kind: input, shape index: {}]
  %s1 = inlined_call_operand.vmem [shape: s8[1,120], index: 1, kind: input, shape index: {}]
  %s2 = inlined_call_operand.hbm [shape: f32[1,1], index: 2, kind: output, shape index: {}]
  %s3 = sld [smem:[#allocation0]]
  $region22: #{tpu_custom_call.1} parent=0
    _
  %s5 = ssub.s32 1, %s3
  %s6 = scalar_select 0, %s5, %s3
  $region1: #{tpu_custom_call.1} parent=0
    #allocation2 [shape = 'u8[512]{0}', space=vmem, size = 0x400, scoped, tag = 'input window, operand 0, single buffered']
    #allocation3 [shape = 's32[1]{0}', space=sflag, size = 0x4, scoped, tag = 'scoped memory for tpu_custom_call.1']
    #allocation4 [shape = 's32[1]{0}', space=sflag, size = 0x4, scoped, tag = 'scoped memory for tpu_custom_call.1']
    #allocation5 [shape = 'u8[512]{0}', space=smem, size = 0x200, scoped, tag = 'output window, operand 0, single buffered']
    %7 = vsyncpa [#allocation3], 0
    %8 = vsyncpa [#allocation4], 0
    // Predicated region
    $region2: #{tpu_custom_call.1} parent=1 // pred_check
      _
    $region3: #{tpu_custom_call.1} parent=1 // pred_check_branch
      %10 = sbr.rel (0) target = $region5
    $region4: #{tpu_custom_call.1} parent=1 // pred_region
      %s12 = ssub.s32 16, 16
      %13 = vsyncadd [#allocation3], %s12
      %s15 = sshll.u32 [#allocation2], 4
      %s16 = int_to_ptr.vmem [resolvable:$true] %s15
      %18 = dma.hbm_to_vmem [thread:$0]  %s0, 16, %s16, [#allocation3]
    $region5: #{tpu_custom_call.1} parent=1 // pred_fallthru
      _
    // Predicated region
    $region6: #{tpu_custom_call.1} parent=1 // pred_check
      _
    $region7: #{tpu_custom_call.1} parent=1 // pred_check_branch
      %20 = sbr.rel (0) target = $region9
    $region8: #{tpu_custom_call.1} parent=1 // pred_region
      _
    $region9: #{tpu_custom_call.1} parent=1 // pred_fallthru
      _
    // Predicated region
    $region10: #{tpu_custom_call.1} parent=1 // pred_check
      _
    $region11: #{tpu_custom_call.1} parent=1 // pred_check_branch
      %22 = sbr.rel (0) target = $region13
    $region12: #{tpu_custom_call.1} parent=1 // pred_region
      %23 = dma.done [#allocation3], 16
    $region13: #{tpu_custom_call.1} parent=1 // pred_fallthru
      _
    %v24 = vld [vmem:[#allocation2] sm:$0x1]
    %v25 = vld [vmem:[%s1] sm:$0x1]
    %v26 = vunpack.c.0.s8 %v25
    %v27 = vlaneseq
    %v28 = vand.u32 %v27, 127
    %vm29 = vcmp.lt.s32.totalorder %v28, 0
    %v30 = vsub.s32 0, %v28
    %v31 = vsel %vm29, %v30, %v28
    %v32 = vmul.u32.u64.compose %v31, 3435973837
    %v33 = vextract.low.u32 %v32
    %v34 = vextract.high.u32 %v32
    %v35 = vshrl.u32 %v34, 3
    %v36 = vmul.u32 %v35, 10
    %v37 = vsub.s32 %v31, %v36
    %v38 = vsub.s32 0, %v37
    %v39 = vsel %vm29, %v38, %v37
    %vm40 = vcmp.ne.s32.totalorder %v39, 0
    %vm41 = vcmp.lt.s32.totalorder %v39, 0
    %vm42 = vmand %vm41, %vm40
    %v43 = vadd.s32 %v39, 10
    %v44 = vsel %vm42, %v43, %v39
    %v45 = vsub.f32 0.9, %v24
    %v46 = vmax.f32 %v45, 0.0
    %v47 = vsub.f32 %v24, 0.1
    %v48 = vmax.f32 %v47, 0.0
    %vm49 = vcmp.eq.s32.totalorder %v44, %v26
    %v50 = vmul.f32 %v46, %v46
    %v51 = vmul.f32 %v48, %v48
    %v52 = vmul.f32 %v51, 0.5
    %v53 = vsel %vm49, %v50, %v52
    %vm54 = vcmask 974848
    %v55 = vsel %vm54, %v53, 0.0
    %56 = vadd.xlane.f32.xlu0 %v55
    %v57 = vpop.xlane.xlu0 %56
    %v58 = vrot.slane %v57, 4
    %v59 = vadd.f32 %v57, %v58
    %v60 = vrot.slane %v59, 2
    %v61 = vadd.f32 %v59, %v60
    %v62 = vrot.slane %v61, 1
    %v63 = vadd.f32 %v61, %v62
    %s64 = vtos %v63
    %s65 = scalar_lea.smem [#allocation5], 0
    %66 = sst [smem:[%s65]] %s64
    // Predicated region
    $region14: #{tpu_custom_call.1} parent=1 // pred_check
      _
    $region15: #{tpu_custom_call.1} parent=1 // pred_check_branch
      %68 = sbr.rel (0) target = $region17
    $region16: #{tpu_custom_call.1} parent=1 // pred_region
      %s70 = ssub.s32 16, 16
      %71 = vsyncadd [#allocation4], %s70
      %74 = dma.smem_to_hbm [#allocation5], 16, %s2, [#allocation4]
    $region17: #{tpu_custom_call.1} parent=1 // pred_fallthru
      _
    // Predicated region
    $region18: #{tpu_custom_call.1} parent=1 // pred_check
      _
    $region19: #{tpu_custom_call.1} parent=1 // pred_check_branch
      %76 = sbr.rel (0) target = $region21
    $region20: #{tpu_custom_call.1} parent=1 // pred_region
      %77 = dma.done [#allocation4], 16
    $region21: #{tpu_custom_call.1} parent=1 // pred_fallthru
      _
    %78 = sfence
    %79 = vsyncpa [#allocation3], 1
    %80 = vsyncpa [#allocation4], 1

</llo_original>
